<compile_context>
chip_gen: v5e
topology: v5e:2x2
jax: 0.10.0
libtpu: 0.0.40
codegen_flags: <defaults>
</compile_context>

<pallas_src>
import functools

import jax
import jax.numpy as jnp
from jax.experimental import pallas as pl
from jax.experimental.pallas import tpu as pltpu

LANE = 128                       # lane width: feature dims padded to this.
_DEF_VMEM = 64 * 1024 * 1024     # conservative physical-VMEM fallback (v7x).


def _round_up(x, m):
    return -(-x // m) * m


def _sublane(dtype):
    """Minimum sublane multiple for a block of `dtype` (8 f32 / 16 bf16 / 32 i8)."""
    return max(8, 32 // jnp.dtype(dtype).itemsize)


def _physical_vmem_bytes():
    """Best-effort physical VMEM size; conservative fallback if unavailable."""
    try:
        info = pltpu.get_tpu_info()
        for name in ("vmem_capacity_bytes", "vmem_size_bytes", "vmem_bytes"):
            v = getattr(info, name, None)
            if v:
                return int(v)
    except Exception:
        pass
    return _DEF_VMEM


@functools.lru_cache(maxsize=None)
def _buffered1_supported():
    """Probe whether pipeline_mode=pl.Buffered(1) lowers on this backend.

    Single-buffering the resident weight/bias blocks halves their VMEM cost;
    if the feature is unavailable we silently keep the default (2-deep) specs.
    """
    def _copy(x_ref, o_ref):
        o_ref[...] = x_ref[...]

    try:
        spec = pl.BlockSpec((8, LANE), lambda i: (0, 0),
                            pipeline_mode=pl.Buffered(1))
        out = pl.pallas_call(
            _copy,
            out_shape=jax.ShapeDtypeStruct((8, LANE), jnp.float32),
            grid=(1,),
            in_specs=[spec],
            out_specs=pl.BlockSpec((8, LANE), lambda i: (0, 0)),
        )(jnp.zeros((8, LANE), jnp.float32))
        jax.block_until_ready(out)
        return True
    except Exception:
        return False


def _resident_spec(shape):
    """Spec for a weight/bias that stays resident in VMEM across the grid."""
    if _buffered1_supported():
        return pl.BlockSpec(shape, lambda i: (0, 0), pipeline_mode=pl.Buffered(1))
    return pl.BlockSpec(shape, lambda i: (0, 0))


# ---------------------------------------------------------------------------
# Kernels
# ---------------------------------------------------------------------------

def _mlp_fused_kernel(x_ref, *refs):
    """Fused MLP over one row tile: every Linear(+ReLU) on-chip, f32 accum.

    refs = (w0, b0, w1, b1, ..., w_{L-1}, b_{L-1}, out_ref)
    Weights are (d_in, d_out) in f32 or bf16; biases are (1, d_out) f32.
    """
    *param_refs, out_ref = refs
    n_layers = len(param_refs) // 2

    h = x_ref[...]
    for layer in range(n_layers):
        w = param_refs[2 * layer][...]
        b = param_refs[2 * layer + 1][...]
        # MXU matmul; operands in w.dtype (bf16 fast path), f32 accumulation.
        h = jnp.dot(h.astype(w.dtype), w,
                    preferred_element_type=jnp.float32) + b
        if layer < n_layers - 1:              # ReLU on all but the last Linear
            h = jnp.maximum(h, 0.0)
    out_ref[...] = h.astype(out_ref.dtype)


def _linear_kernel(x_ref, w_ref, b_ref, o_ref, acc_ref, *, apply_relu):
    """One K-tiled Linear (+optional ReLU): tiled-matmul accumulator pattern."""
    k = pl.program_id(2)

    @pl.when(k == 0)
    def _():
        acc_ref[...] = jnp.zeros_like(acc_ref)

    acc_ref[...] += jnp.dot(x_ref[...], w_ref[...],
                            preferred_element_type=jnp.float32)

    @pl.when(k == pl.num_programs(2) - 1)
    def _():
        y = acc_ref[...] + b_ref[...]
        if apply_relu:
            y = jnp.maximum(y, 0.0)
        o_ref[...] = y.astype(o_ref.dtype)


# ---------------------------------------------------------------------------
# Wrapper
# ---------------------------------------------------------------------------

def _lane_tile(dim, cap=512):
    """Largest multiple of LANE that divides `dim` (a multiple of LANE), <= cap."""
    t = max(LANE, min(cap, dim) // LANE * LANE)
    while dim % t:
        t -= LANE
    return t


def _choose_tile_m(rows, sub, per_row_bytes, avail_bytes, cap=512):
    """Row tile: multiple of `sub`, grid >= 2 when possible (megacore + pipelining),
    shrunk until the per-step activation footprint fits the VMEM budget."""
    tile = max(sub, min(cap, _round_up(pl.cdiv(rows, 2), sub)))
    while tile > sub and tile * per_row_bytes > avail_bytes:
        tile -= sub
    return tile


def _linear_layer(h, w, b, *, apply_relu, out_dtype, tile_m, vmem_phys):
    """Streaming per-layer path: K-tiled matmul + fused bias/ReLU."""
    M, K = h.shape
    N = w.shape[1]
    tk = _lane_tile(K)
    tn = _lane_tile(N)
    grid = (M // tile_m, N // tn, K // tk)

    step_bytes = (2 * tile_m * tk * h.dtype.itemsize     # x blocks (2-deep)
                  + 2 * tk * tn * w.dtype.itemsize       # w blocks
                  + 2 * tn * 4                           # bias blocks
                  + 2 * tile_m * tn * jnp.dtype(out_dtype).itemsize
                  + tile_m * tn * 4)                     # f32 accumulator
    vmem_limit = min(vmem_phys, max(32 << 20, int(1.5 * step_bytes) + (4 << 20)))

    cost = pl.CostEstimate(
        flops=int(2 * M * N * K),
        transcendentals=0,
        bytes_accessed=int(h.size * h.dtype.itemsize
                           + w.size * w.dtype.itemsize
                           + b.size * 4
                           + M * N * jnp.dtype(out_dtype).itemsize))

    return pl.pallas_call(
        functools.partial(_linear_kernel, apply_relu=apply_relu),
        out_shape=jax.ShapeDtypeStruct((M, N), out_dtype),
        grid=grid,
        in_specs=[pl.BlockSpec((tile_m, tk), lambda i, j, k: (i, k)),
                  pl.BlockSpec((tk, tn), lambda i, j, k: (k, j)),
                  pl.BlockSpec((1, tn), lambda i, j, k: (0, j))],
        out_specs=pl.BlockSpec((tile_m, tn), lambda i, j, k: (i, j)),
        scratch_shapes=[pltpu.VMEM((tile_m, tn), jnp.float32)],
        compiler_params=pltpu.CompilerParams(
            dimension_semantics=("parallel", "parallel", "arbitrary"),
            vmem_limit_bytes=vmem_limit),
        cost_estimate=cost,
    )(h, w, b)


def mlp_forward(x, params, *, tile_m=None, use_bf16_operands=False,
                max_resident_param_bytes=None):
    """x: (..., input_dim) -> (..., output_dim).  Pallas TPU forward of `MLP`."""
    weights = params["weights"]               # list of (d_in, d_out)
    biases = params["biases"]                 # list of (1, d_out) or (d_out,)

    if len(weights) == 0:                     # num_layers == 0 -> nn.Identity
        return x

    n_layers = len(weights)
    dims = [int(w.shape[0]) for w in weights] + [int(weights[-1].shape[1])]
    pdims = [_round_up(d, LANE) for d in dims]
    d_in, d_out = dims[0], dims[-1]

    lead_shape = x.shape[:-1]
    x2 = x.reshape(-1, d_in)                  # flatten leading dims (free)
    rows = x2.shape[0]

    compute_dtype = jnp.bfloat16 if use_bf16_operands else jnp.float32

    # Zero-pad every feature dim to a multiple of 128: lane-dense stores and
    # full MXU tiles.  Zero padding is exact under Linear + ReLU.
    pw, pb = [], []
    for l, (w, b) in enumerate(zip(weights, biases)):
        wp = jnp.pad(w, ((0, pdims[l] - dims[l]), (0, pdims[l + 1] - dims[l + 1])))
        pw.append(wp.astype(compute_dtype))
        bp = jnp.asarray(b, jnp.float32).reshape(1, -1)
        pb.append(jnp.pad(bp, ((0, 0), (0, pdims[l + 1] - dims[l + 1]))))
    if pdims[0] != d_in:
        x2 = jnp.pad(x2, ((0, 0), (0, pdims[0] - d_in)))

    x_item = jnp.dtype(x.dtype).itemsize
    vmem_phys = _physical_vmem_bytes()
    param_buf = 1 if _buffered1_supported() else 2
    param_bytes = (sum(int(w.size) * w.dtype.itemsize for w in pw)
                   + sum(int(b.size) * 4 for b in pb))
    resident_bytes = param_buf * param_bytes

    if max_resident_param_bytes is None:
        max_resident_param_bytes = vmem_phys // 2
    use_fused = resident_bytes <= max_resident_param_bytes

    if use_fused:
        sub = _sublane(x.dtype)
        # Per-row VMEM: double-buffered x/out blocks + live f32 intermediates.
        per_row = (2 * pdims[0] * x_item + 2 * pdims[-1] * x_item
                   + 3 * max(pdims) * 4)
        if tile_m is None:
            avail = max(vmem_phys - resident_bytes - (8 << 20), 2 << 20)
            tile_m = _choose_tile_m(rows, sub, per_row, avail)
        else:
            tile_m = _round_up(tile_m, sub)
        rows_pad = _round_up(rows, tile_m)
        if rows_pad != rows:
            x2 = jnp.pad(x2, ((0, rows_pad - rows), (0, 0)))

        vmem_limit = min(
            vmem_phys,
            max(32 << 20,
                int(1.25 * (resident_bytes + tile_m * per_row)) + (4 << 20)))

        in_specs = [pl.BlockSpec((tile_m, pdims[0]), lambda i: (i, 0))]
        flat_params = []
        for w, b in zip(pw, pb):
            in_specs.append(_resident_spec(w.shape))   # resident in VMEM
            in_specs.append(_resident_spec(b.shape))
            flat_params.extend((w, b))

        flops = 2 * rows_pad * sum(pdims[l] * pdims[l + 1] for l in range(n_layers))
        cost = pl.CostEstimate(
            flops=int(flops), transcendentals=0,
            bytes_accessed=int(x2.size * x_item + param_bytes
                               + rows_pad * pdims[-1] * x_item))

        out = pl.pallas_call(
            _mlp_fused_kernel,
            out_shape=jax.ShapeDtypeStruct((rows_pad, pdims[-1]), x.dtype),
            grid=(rows_pad // tile_m,),
            in_specs=in_specs,
            out_specs=pl.BlockSpec((tile_m, pdims[-1]), lambda i: (i, 0)),
            compiler_params=pltpu.CompilerParams(
                dimension_semantics=("parallel",),
                vmem_limit_bytes=vmem_limit),
            cost_estimate=cost,
        )(x2, *flat_params)
    else:
        # Streaming fallback: weights too big to keep resident (e.g. v7x 64 MiB
        # VMEM) -> per-layer K-tiled matmul; higher HBM BW chips absorb the
        # per-layer weight streaming cheaply.
        sub = max(_sublane(x.dtype), _sublane(compute_dtype))
        if tile_m is None:
            tile_m = max(sub, min(512, _round_up(pl.cdiv(rows, 2), sub)))
        else:
            tile_m = _round_up(tile_m, sub)
        rows_pad = _round_up(rows, tile_m)
        if rows_pad != rows:
            x2 = jnp.pad(x2, ((0, rows_pad - rows), (0, 0)))
        h = x2.astype(compute_dtype) if use_bf16_operands else x2
        for layer in range(n_layers):
            last = layer == n_layers - 1
            h = _linear_layer(
                h, pw[layer], pb[layer],
                apply_relu=not last,
                out_dtype=(x.dtype if last else compute_dtype),
                tile_m=tile_m, vmem_phys=vmem_phys)
        out = h

    out = out[:rows, :d_out]
    return out.reshape(*lead_shape, d_out)


mlp_forward_jit = jax.jit(
    mlp_forward,
    static_argnames=("tile_m", "use_bf16_operands", "max_resident_param_bytes"))


# ---------------------------------------------------------------------------
# Params / reference
# ---------------------------------------------------------------------------

def init_params(key, input_dim, hidden_dim, output_dim, num_layers):
    """PyTorch nn.Linear default init; weights stored pre-transposed (in, out)."""
    if num_layers == 0:
        dims = []
    elif num_layers == 1:
        dims = [(input_dim, output_dim)]
    else:
        dims = ([(input_dim, hidden_dim)]
                + [(hidden_dim, hidden_dim)] * (num_layers - 2)
                + [(hidden_dim, output_dim)])

    weights, biases = [], []
    for fan_in, fan_out in dims:
        key, k_w, k_b = jax.random.split(key, 3)
        bound = 1.0 / jnp.sqrt(fan_in)
        w = jax.random.uniform(k_w, (fan_out, fan_in), jnp.float32, -bound, bound).T
        b = jax.random.uniform(k_b, (fan_out,), jnp.float32, -bound, bound)
        weights.append(jnp.asarray(w, jnp.float32))
        biases.append(b.reshape(1, -1).astype(jnp.float32))
    return {"weights": weights, "biases": biases}


def reference_forward(x, params):
    """Pure-JAX reference replicating the PyTorch forward exactly (f32)."""
    h = x
    n = len(params["weights"])
    for layer, (w, b) in enumerate(zip(params["weights"], params["biases"])):
        h = jnp.dot(h, w, precision=jax.lax.Precision.HIGHEST) + b
        if layer < n - 1:
            h = jax.nn.relu(h)
    return h


if __name__ == "__main__":
    B, S, D_IN, D_HID, D_OUT = 2, 8, 16, 32, 16

    key = jax.random.PRNGKey(0)
    k_x, k_p1, k_p2 = jax.random.split(key, 3)
    x = jax.random.normal(k_x, (B, S, D_IN), jnp.float32)

    # num_layers >= 2 path (Linear -> ReLU -> Linear -> ReLU -> Linear).
    params3 = init_params(k_p1, D_IN, D_HID, D_OUT, num_layers=3)
    ref3 = reference_forward(x, params3)

    # Fused resident-weights kernel, f32 operands (matches f32 module).
    out3 = jax.block_until_ready(mlp_forward_jit(x, params3))
    assert out3.shape == (B, S, D_OUT)
    assert jnp.allclose(out3, ref3, rtol=1e-4, atol=1e-4), "mismatch (fused f32)"

    # Fused kernel, bf16 operand fast path (f32 accumulation) -> looser tol.
    out3_bf16 = jax.block_until_ready(
        mlp_forward_jit(x, params3, use_bf16_operands=True))
    assert jnp.allclose(out3_bf16, ref3, rtol=5e-2, atol=5e-2), "mismatch (fused bf16)"

    # Streaming per-layer K-tiled fallback (forced via tiny residency budget).
    out3_stream = jax.block_until_ready(
        mlp_forward_jit(x, params3, max_resident_param_bytes=0))
    assert jnp.allclose(out3_stream, ref3, rtol=1e-4, atol=1e-4), "mismatch (streaming)"

    # num_layers == 1 path (single Linear, no ReLU).
    params1 = init_params(k_p2, D_IN, D_HID, D_OUT, num_layers=1)
    out1 = jax.block_until_ready(mlp_forward_jit(x, params1))
    assert jnp.allclose(out1, reference_forward(x, params1),
                        rtol=1e-4, atol=1e-4), "mismatch (num_layers=1)"

    # num_layers == 0 path (Identity, handled in the wrapper without a kernel).
    params0 = init_params(k_p2, D_IN, D_HID, D_OUT, num_layers=0)
    out0 = mlp_forward(x, params0)
    assert jnp.allclose(out0, x), "mismatch (num_layers=0)"

    print("KERNEL_OK")
</pallas_src>

<mosaic_0001>
module attributes {stable_mosaic.version = 11 : i64} {
  func.func @_mlp_fused_kernel(%arg0: i32, %arg1: memref<8x128xf32, #tpu.memory_space<vmem>>, %arg2: memref<128x128xf32, #tpu.memory_space<vmem>>, %arg3: memref<1x128xf32, #tpu.memory_space<vmem>>, %arg4: memref<128x128xf32, #tpu.memory_space<vmem>>, %arg5: memref<1x128xf32, #tpu.memory_space<vmem>>, %arg6: memref<128x128xf32, #tpu.memory_space<vmem>>, %arg7: memref<1x128xf32, #tpu.memory_space<vmem>>, %arg8: memref<8x128xf32, #tpu.memory_space<vmem>>) attributes {dimension_semantics = [#tpu.dimension_semantics<parallel>], iteration_bounds = array<i64: 2>, scalar_prefetch = 0 : i64, scratch_operands = 0 : i64, tpu.core_type = #tpu.core_type<tc>, window_params = [{transform_indices = @transform_0, window_bounds = array<i64: 8, 128>}, {pipeline_mode = #tpu.pipeline_mode<synchronous>, transform_indices = @transform_1, window_bounds = array<i64: 128, 128>}, {pipeline_mode = #tpu.pipeline_mode<synchronous>, transform_indices = @transform_2, window_bounds = array<i64: 1, 128>}, {pipeline_mode = #tpu.pipeline_mode<synchronous>, transform_indices = @transform_3, window_bounds = array<i64: 128, 128>}, {pipeline_mode = #tpu.pipeline_mode<synchronous>, transform_indices = @transform_4, window_bounds = array<i64: 1, 128>}, {pipeline_mode = #tpu.pipeline_mode<synchronous>, transform_indices = @transform_5, window_bounds = array<i64: 128, 128>}, {pipeline_mode = #tpu.pipeline_mode<synchronous>, transform_indices = @transform_6, window_bounds = array<i64: 1, 128>}, {transform_indices = @transform_7, window_bounds = array<i64: 8, 128>}]} {
    %c0 = arith.constant 0 : index
    %c0_0 = arith.constant 0 : index
    %0 = vector.load %arg1[%c0, %c0_0] : memref<8x128xf32, #tpu.memory_space<vmem>>, vector<8x128xf32>
    %c0_1 = arith.constant 0 : index
    %c0_2 = arith.constant 0 : index
    %1 = vector.load %arg2[%c0_1, %c0_2] : memref<128x128xf32, #tpu.memory_space<vmem>>, vector<128x128xf32>
    %c0_3 = arith.constant 0 : index
    %c0_4 = arith.constant 0 : index
    %2 = vector.load %arg3[%c0_3, %c0_4] : memref<1x128xf32, #tpu.memory_space<vmem>>, vector<1x128xf32>
    %cst = arith.constant dense<0.000000e+00> : vector<8x128xf32>
    %3 = tpu.matmul %0, %1, %cst {dimension_numbers = #tpu.dot_dimension_numbers<[1], [0], [0], [1], [0, 0, 1, 1], [], []>} : vector<8x128xf32>, vector<128x128xf32>, vector<8x128xf32> -> vector<8x128xf32>
    %4 = vector.broadcast %2 : vector<1x128xf32> to vector<8x128xf32>
    %5 = arith.addf %3, %4 : vector<8x128xf32>
    %cst_5 = arith.constant 0.000000e+00 : f32
    %6 = vector.broadcast %cst_5 : f32 to vector<8x128xf32>
    %7 = arith.maximumf %5, %6 : vector<8x128xf32>
    %c0_6 = arith.constant 0 : index
    %c0_7 = arith.constant 0 : index
    %8 = vector.load %arg4[%c0_6, %c0_7] : memref<128x128xf32, #tpu.memory_space<vmem>>, vector<128x128xf32>
    %c0_8 = arith.constant 0 : index
    %c0_9 = arith.constant 0 : index
    %9 = vector.load %arg5[%c0_8, %c0_9] : memref<1x128xf32, #tpu.memory_space<vmem>>, vector<1x128xf32>
    %cst_10 = arith.constant dense<0.000000e+00> : vector<8x128xf32>
    %10 = tpu.matmul %7, %8, %cst_10 {dimension_numbers = #tpu.dot_dimension_numbers<[1], [0], [0], [1], [0, 0, 1, 1], [], []>} : vector<8x128xf32>, vector<128x128xf32>, vector<8x128xf32> -> vector<8x128xf32>
    %11 = vector.broadcast %9 : vector<1x128xf32> to vector<8x128xf32>
    %12 = arith.addf %10, %11 : vector<8x128xf32>
    %cst_11 = arith.constant 0.000000e+00 : f32
    %13 = vector.broadcast %cst_11 : f32 to vector<8x128xf32>
    %14 = arith.maximumf %12, %13 : vector<8x128xf32>
    %c0_12 = arith.constant 0 : index
    %c0_13 = arith.constant 0 : index
    %15 = vector.load %arg6[%c0_12, %c0_13] : memref<128x128xf32, #tpu.memory_space<vmem>>, vector<128x128xf32>
    %c0_14 = arith.constant 0 : index
    %c0_15 = arith.constant 0 : index
    %16 = vector.load %arg7[%c0_14, %c0_15] : memref<1x128xf32, #tpu.memory_space<vmem>>, vector<1x128xf32>
    %cst_16 = arith.constant dense<0.000000e+00> : vector<8x128xf32>
    %17 = tpu.matmul %14, %15, %cst_16 {dimension_numbers = #tpu.dot_dimension_numbers<[1], [0], [0], [1], [0, 0, 1, 1], [], []>} : vector<8x128xf32>, vector<128x128xf32>, vector<8x128xf32> -> vector<8x128xf32>
    %18 = vector.broadcast %16 : vector<1x128xf32> to vector<8x128xf32>
    %19 = arith.addf %17, %18 : vector<8x128xf32>
    %c0_17 = arith.constant 0 : index
    %c0_18 = arith.constant 0 : index
    %20 = vector.load %arg8[%c0_17, %c0_18] : memref<8x128xf32, #tpu.memory_space<vmem>>, vector<8x128xf32>
    tpu.vector_store %arg8[%c0_17, %c0_18], %19 {strides = array<i32>} : memref<8x128xf32, #tpu.memory_space<vmem>>, vector<8x128xf32>,
    return
  }
  func.func @transform_0(%arg0: i32) -> (i32, i32) {
    %c0_i32 = arith.constant 0 : i32
    %c0_i32_0 = arith.constant 0 : i32
    return %arg0, %c0_i32 : i32, i32
  }
  func.func @transform_1(%arg0: i32) -> (i32, i32) {
    %c0_i32 = arith.constant 0 : i32
    %c0_i32_0 = arith.constant 0 : i32
    %c0_i32_1 = arith.constant 0 : i32
    return %c0_i32, %c0_i32_0 : i32, i32
  }
  func.func @transform_2(%arg0: i32) -> (i32, i32) {
    %c0_i32 = arith.constant 0 : i32
    %c0_i32_0 = arith.constant 0 : i32
    %c0_i32_1 = arith.constant 0 : i32
    return %c0_i32, %c0_i32_0 : i32, i32
  }
  func.func @transform_3(%arg0: i32) -> (i32, i32) {
    %c0_i32 = arith.constant 0 : i32
    %c0_i32_0 = arith.constant 0 : i32
    %c0_i32_1 = arith.constant 0 : i32
    return %c0_i32, %c0_i32_0 : i32, i32
  }
  func.func @transform_4(%arg0: i32) -> (i32, i32) {
    %c0_i32 = arith.constant 0 : i32
    %c0_i32_0 = arith.constant 0 : i32
    %c0_i32_1 = arith.constant 0 : i32
    return %c0_i32, %c0_i32_0 : i32, i32
  }
  func.func @transform_5(%arg0: i32) -> (i32, i32) {
    %c0_i32 = arith.constant 0 : i32
    %c0_i32_0 = arith.constant 0 : i32
    %c0_i32_1 = arith.constant 0 : i32
    return %c0_i32, %c0_i32_0 : i32, i32
  }
  func.func @transform_6(%arg0: i32) -> (i32, i32) {
    %c0_i32 = arith.constant 0 : i32
    %c0_i32_0 = arith.constant 0 : i32
    %c0_i32_1 = arith.constant 0 : i32
    return %c0_i32, %c0_i32_0 : i32, i32
  }
  func.func @transform_7(%arg0: i32) -> (i32, i32) {
    %c0_i32 = arith.constant 0 : i32
    %c0_i32_0 = arith.constant 0 : i32
    return %arg0, %c0_i32 : i32, i32
  }
}

</mosaic_0001>

<llo_original>
// kernel: mlp_forward.1
$region0: #{mlp_forward.1}
  #allocation0 [shape = 'u32[]', space=smem, size = 0x4, offset = 0x4, fixed_abs, tag = 'smem constant byte address 0x4 - core index']
  #allocation1 [shape = 'u32[72,128]{1,0:T(1,128)}', space=vmem, size = 0x9000, scoped, tag = 'internal scratch']
  %s0 = inlined_call_operand.vmem [shape: f32[16,128], index: 0, kind: input, shape index: {}]
  %s1 = inlined_call_operand.vmem [shape: f32[128,128], index: 1, kind: input, shape index: {}]
  %s2 = inlined_call_operand.vmem [shape: f32[1,128], index: 2, kind: input, shape index: {}]
  %s3 = inlined_call_operand.vmem [shape: f32[128,128], index: 3, kind: input, shape index: {}]
  %s4 = inlined_call_operand.vmem [shape: f32[1,128], index: 4, kind: input, shape index: {}]
  %s5 = inlined_call_operand.vmem [shape: f32[128,128], index: 5, kind: input, shape index: {}]
  %s6 = inlined_call_operand.vmem [shape: f32[1,128], index: 6, kind: input, shape index: {}]
  %s7 = inlined_call_operand.vmem [shape: f32[16,128], index: 7, kind: output, shape index: {}]
  %s8 = sld [smem:[#allocation0]]
  $region61: #{mlp_forward.1} parent=0
    _
  %s10 = ssub.s32 1, %s8
  %s11 = scalar_select 0, %s10, %s8
  loop: start=0, step=1, limit=4
  $region2: #{mlp_forward.1} parent=0 // loop_pre_header
    _
  $region3: #{mlp_forward.1} parent=0 // loop_header
    %s13 = sphi 0, %s17
    %p14 = scmp.ge.s32.totalorder %s13, 4
    %s23 = sphi 0, %s25
    %s26 = sphi 0, %s23
    %s27 = sphi 0, %s26
    %s43 = sphi 0, %s27
    %s47 = sphi 0, %s47
    %s49 = sphi 0, %s47
    %s50 = sphi 0, %s49
    %s64 = sphi 0, %s50
    %s68 = sphi 0, %s68
    %s70 = sphi 0, %s68
    %s71 = sphi 0, %s70
    %s85 = sphi 0, %s71
    %s89 = sphi 0, %s89
    %s91 = sphi 0, %s89
    %s92 = sphi 0, %s91
    %s106 = sphi 0, %s92
    %s110 = sphi 0, %s110
    %s112 = sphi 0, %s110
    %s113 = sphi 0, %s112
    %s127 = sphi 0, %s113
    %s131 = sphi 0, %s131
    %s133 = sphi 0, %s131
    %s134 = sphi 0, %s133
    %s148 = sphi 0, %s134
    %s152 = sphi 0, %s152
    %s154 = sphi 0, %s152
    %s155 = sphi 0, %s154
    %s169 = sphi 0, %s155
    %s175 = sphi 0, %s177
    %s178 = sphi 0, %s175
    %s179 = sphi 0, %s178
    %s195 = sphi 0, %s179
  $region4: #{mlp_forward.1} parent=0 // loop_header_branch
    %16 = sbr.rel (%p14) target = $region8
  $region5: #{mlp_forward.1} parent=0 // loop_body
    %s18 = ssub.s32 %s13, 1
    %s19 = ssub.s32 %s13, 2
    %s20 = sadd.s32 %s13, 1
    %s21 = ssub.s32 %s13, %s20
    %p22 = scmp.eq.s32.totalorder %s21, 0
    %s24 = sadd.s32 %s23, 1
    %s25 = scalar_select %p22, %s23, %s24
    %p28 = pneg %p22
    %p29 = scmp.eq.s32.totalorder %s13, 1
    %p30 = por %p28, %p29
    %p31 = scmp.ne.s32.totalorder %s23, %s26
    %p32 = scmp.eq.s32.totalorder %s13, 0
    %p33 = por %p31, %p32
    %p34 = scmp.ne.s32.totalorder %s23, %s26
    %p35 = scmp.eq.s32.totalorder %s18, 1
    %p36 = por %p34, %p35
    %p37 = scmp.ne.s32.totalorder %s26, %s27
    %p38 = scmp.eq.s32.totalorder %s18, 0
    %p39 = por %p37, %p38
    %p40 = scmp.ne.s32.totalorder %s26, %s27
    %p41 = scmp.eq.s32.totalorder %s19, 1
    %p42 = por %p40, %p41
    %p44 = scmp.ne.s32.totalorder %s27, %s43
    %p45 = scmp.eq.s32.totalorder %s19, 0
    %p46 = por %p44, %p45
    %s48 = sadd.s32 %s47, 1
    %p51 = scmp.eq.s32.totalorder %s13, 1
    %p52 = scmp.ne.s32.totalorder %s47, %s49
    %p53 = scmp.eq.s32.totalorder %s13, 0
    %p54 = por %p52, %p53
    %p55 = scmp.ne.s32.totalorder %s47, %s49
    %p56 = scmp.eq.s32.totalorder %s18, 1
    %p57 = por %p55, %p56
    %p58 = scmp.ne.s32.totalorder %s49, %s50
    %p59 = scmp.eq.s32.totalorder %s18, 0
    %p60 = por %p58, %p59
    %p61 = scmp.ne.s32.totalorder %s49, %s50
    %p62 = scmp.eq.s32.totalorder %s19, 1
    %p63 = por %p61, %p62
    %p65 = scmp.ne.s32.totalorder %s50, %s64
    %p66 = scmp.eq.s32.totalorder %s19, 0
    %p67 = por %p65, %p66
    %s69 = sadd.s32 %s68, 1
    %p72 = scmp.eq.s32.totalorder %s13, 1
    %p73 = scmp.ne.s32.totalorder %s68, %s70
    %p74 = scmp.eq.s32.totalorder %s13, 0
    %p75 = por %p73, %p74
    %p76 = scmp.ne.s32.totalorder %s68, %s70
    %p77 = scmp.eq.s32.totalorder %s18, 1
    %p78 = por %p76, %p77
    %p79 = scmp.ne.s32.totalorder %s70, %s71
    %p80 = scmp.eq.s32.totalorder %s18, 0
    %p81 = por %p79, %p80
    %p82 = scmp.ne.s32.totalorder %s70, %s71
    %p83 = scmp.eq.s32.totalorder %s19, 1
    %p84 = por %p82, %p83
    %p86 = scmp.ne.s32.totalorder %s71, %s85
    %p87 = scmp.eq.s32.totalorder %s19, 0
    %p88 = por %p86, %p87
    %s90 = sadd.s32 %s89, 1
    %p93 = scmp.eq.s32.totalorder %s13, 1
    %p94 = scmp.ne.s32.totalorder %s89, %s91
    %p95 = scmp.eq.s32.totalorder %s13, 0
    %p96 = por %p94, %p95
    %p97 = scmp.ne.s32.totalorder %s89, %s91
    %p98 = scmp.eq.s32.totalorder %s18, 1
    %p99 = por %p97, %p98
    %p100 = scmp.ne.s32.totalorder %s91, %s92
    %p101 = scmp.eq.s32.totalorder %s18, 0
    %p102 = por %p100, %p101
    %p103 = scmp.ne.s32.totalorder %s91, %s92
    %p104 = scmp.eq.s32.totalorder %s19, 1
    %p105 = por %p103, %p104
    %p107 = scmp.ne.s32.totalorder %s92, %s106
    %p108 = scmp.eq.s32.totalorder %s19, 0
    %p109 = por %p107, %p108
    %s111 = sadd.s32 %s110, 1
    %p114 = scmp.eq.s32.totalorder %s13, 1
    %p115 = scmp.ne.s32.totalorder %s110, %s112
    %p116 = scmp.eq.s32.totalorder %s13, 0
    %p117 = por %p115, %p116
    %p118 = scmp.ne.s32.totalorder %s110, %s112
    %p119 = scmp.eq.s32.totalorder %s18, 1
    %p120 = por %p118, %p119
    %p121 = scmp.ne.s32.totalorder %s112, %s113
    %p122 = scmp.eq.s32.totalorder %s18, 0
    %p123 = por %p121, %p122
    %p124 = scmp.ne.s32.totalorder %s112, %s113
    %p125 = scmp.eq.s32.totalorder %s19, 1
    %p126 = por %p124, %p125
    %p128 = scmp.ne.s32.totalorder %s113, %s127
    %p129 = scmp.eq.s32.totalorder %s19, 0
    %p130 = por %p128, %p129
    %s132 = sadd.s32 %s131, 1
    %p135 = scmp.eq.s32.totalorder %s13, 1
    %p136 = scmp.ne.s32.totalorder %s131, %s133
    %p137 = scmp.eq.s32.totalorder %s13, 0
    %p138 = por %p136, %p137
    %p139 = scmp.ne.s32.totalorder %s131, %s133
    %p140 = scmp.eq.s32.totalorder %s18, 1
    %p141 = por %p139, %p140
    %p142 = scmp.ne.s32.totalorder %s133, %s134
    %p143 = scmp.eq.s32.totalorder %s18, 0
    %p144 = por %p142, %p143
    %p145 = scmp.ne.s32.totalorder %s133, %s134
    %p146 = scmp.eq.s32.totalorder %s19, 1
    %p147 = por %p145, %p146
    %p149 = scmp.ne.s32.totalorder %s134, %s148
    %p150 = scmp.eq.s32.totalorder %s19, 0
    %p151 = por %p149, %p150
    %s153 = sadd.s32 %s152, 1
    %p156 = scmp.eq.s32.totalorder %s13, 1
    %p157 = scmp.ne.s32.totalorder %s152, %s154
    %p158 = scmp.eq.s32.totalorder %s13, 0
    %p159 = por %p157, %p158
    %p160 = scmp.ne.s32.totalorder %s152, %s154
    %p161 = scmp.eq.s32.totalorder %s18, 1
    %p162 = por %p160, %p161
    %p163 = scmp.ne.s32.totalorder %s154, %s155
    %p164 = scmp.eq.s32.totalorder %s18, 0
    %p165 = por %p163, %p164
    %p166 = scmp.ne.s32.totalorder %s154, %s155
    %p167 = scmp.eq.s32.totalorder %s19, 1
    %p168 = por %p166, %p167
    %p170 = scmp.ne.s32.totalorder %s155, %s169
    %p171 = scmp.eq.s32.totalorder %s19, 0
    %p172 = por %p170, %p171
    %s173 = ssub.s32 %s13, %s20
    %p174 = scmp.eq.s32.totalorder %s173, 0
    %s176 = sadd.s32 %s175, 1
    %s177 = scalar_select %p174, %s175, %s176
    %p180 = pneg %p174
    %p181 = scmp.eq.s32.totalorder %s13, 1
    %p182 = por %p180, %p181
    %p183 = scmp.ne.s32.totalorder %s175, %s178
    %p184 = scmp.eq.s32.totalorder %s13, 0
    %p185 = por %p183, %p184
    %p186 = scmp.ne.s32.totalorder %s175, %s178
    %p187 = scmp.eq.s32.totalorder %s18, 1
    %p188 = por %p186, %p187
    %p189 = scmp.ne.s32.totalorder %s178, %s179
    %p190 = scmp.eq.s32.totalorder %s18, 0
    %p191 = por %p189, %p190
    %p192 = scmp.ne.s32.totalorder %s178, %s179
    %p193 = scmp.eq.s32.totalorder %s19, 1
    %p194 = por %p192, %p193
    %p196 = scmp.ne.s32.totalorder %s179, %s195
    %p197 = scmp.eq.s32.totalorder %s19, 0
    %p198 = por %p196, %p197
    %p199 = scmp.le.s32.totalorder 1, %s13
    %p200 = scmp.lt.s32.totalorder %s13, 3
    %p201 = pnand %p199, %p200
    %p202 = pneg %p201
    // Predicated region
    $region9: #{mlp_forward.1} parent=5 // pred_check
      _
    $region10: #{mlp_forward.1} parent=5 // pred_check_branch
      %204 = sbr.rel (%p201) target = $region12
    $region11: #{mlp_forward.1} parent=5 // pred_region
      %s205 = ssub.s32 %s13, 1
      // Predicated region
      $region13: #{mlp_forward.1} parent=11 // pred_check
        %p206 = pneg %p60
      $region14: #{mlp_forward.1} parent=11 // pred_check_branch
        %208 = sbr.rel (%p206) target = $region16
      $region15: #{mlp_forward.1} parent=11 // pred_region
        _
      $region16: #{mlp_forward.1} parent=11 // pred_fallthru
        _
      // Predicated region
      $region17: #{mlp_forward.1} parent=11 // pred_check
        %p209 = pneg %p81
      $region18: #{mlp_forward.1} parent=11 // pred_check_branch
        %211 = sbr.rel (%p209) target = $region20
      $region19: #{mlp_forward.1} parent=11 // pred_region
        _
      $region20: #{mlp_forward.1} parent=11 // pred_fallthru
        _
      // Predicated region
      $region21: #{mlp_forward.1} parent=11 // pred_check
        %p212 = pneg %p102
      $region22: #{mlp_forward.1} parent=11 // pred_check_branch
        %214 = sbr.rel (%p212) target = $region24
      $region23: #{mlp_forward.1} parent=11 // pred_region
        _
      $region24: #{mlp_forward.1} parent=11 // pred_fallthru
        _
      // Predicated region
      $region25: #{mlp_forward.1} parent=11 // pred_check
        %p215 = pneg %p123
      $region26: #{mlp_forward.1} parent=11 // pred_check_branch
        %217 = sbr.rel (%p215) target = $region28
      $region27: #{mlp_forward.1} parent=11 // pred_region
        _
      $region28: #{mlp_forward.1} parent=11 // pred_fallthru
        _
      // Predicated region
      $region29: #{mlp_forward.1} parent=11 // pred_check
        %p218 = pneg %p144
      $region30: #{mlp_forward.1} parent=11 // pred_check_branch
        %220 = sbr.rel (%p218) target = $region32
      $region31: #{mlp_forward.1} parent=11 // pred_region
        _
      $region32: #{mlp_forward.1} parent=11 // pred_fallthru
        _
      // Predicated region
      $region33: #{mlp_forward.1} parent=11 // pred_check
        %p221 = pneg %p165
      $region34: #{mlp_forward.1} parent=11 // pred_check_branch
        %223 = sbr.rel (%p221) target = $region36
      $region35: #{mlp_forward.1} parent=11 // pred_region
        _
      $region36: #{mlp_forward.1} parent=11 // pred_fallthru
        _
    $region12: #{mlp_forward.1} parent=5 // pred_fallthru
      _
    %p224 = scmp.lt.s32.totalorder %s13, 2
    // Predicated region
    $region37: #{mlp_forward.1} parent=5 // pred_check
      %p225 = pneg %p224
    $region38: #{mlp_forward.1} parent=5 // pred_check_branch
      %227 = sbr.rel (%p225) target = $region40
    $region39: #{mlp_forward.1} parent=5 // pred_region
      // Predicated region
      $region41: #{mlp_forward.1} parent=39 // pred_check
        %p228 = pneg %p33
      $region42: #{mlp_forward.1} parent=39 // pred_check_branch
        %230 = sbr.rel (%p228) target = $region44
      $region43: #{mlp_forward.1} parent=39 // pred_region
        %p231 = scmp.lt.s32.totalorder %s13, 1
        %s232 = scalar_select %p231, %s13, 1
        %s233 = smul.addr %s232, 8
        %s234 = scalar_lea.vmem %s0, %s233
      $region44: #{mlp_forward.1} parent=39 // pred_fallthru
        _
    $region40: #{mlp_forward.1} parent=5 // pred_fallthru
      _
    %p235 = scmp.le.s32.totalorder 1, %s13
    %p236 = scmp.lt.s32.totalorder %s13, 3
    %p237 = pnand %p235, %p236
    %p238 = pneg %p237
    // Predicated region
    $region45: #{mlp_forward.1} parent=5 // pred_check
      _
    $region46: #{mlp_forward.1} parent=5 // pred_check_branch
      %240 = sbr.rel (%p237) target = $region48
    $region47: #{mlp_forward.1} parent=5 // pred_region
      %s241 = ssub.s32 %s13, 1
      %p242 = scmp.lt.s32.totalorder %s18, 1
      %s243 = scalar_select %p242, %s18, 1
      %s244 = smul.addr %s243, 8
      %s245 = scalar_lea.vmem %s0, %s244
      %p246 = pneg %p39
      %p247 = pneg %p36
      %p248 = pneg %p60
      %p249 = pneg %p57
      %p250 = pneg %p81
      %p251 = pneg %p78
      %p252 = pneg %p102
      %p253 = pneg %p99
      %p254 = pneg %p123
      %p255 = pneg %p120
      %p256 = pneg %p144
      %p257 = pneg %p141
      %p258 = pneg %p165
      %p259 = pneg %p162
      %p260 = pneg %p191
      %p261 = pneg %p188
      %p262 = scmp.lt.s32.totalorder %s18, 1
      %s263 = scalar_select %p262, %s18, 1
      %s264 = smul.addr %s263, 8
      %s265 = scalar_lea.vmem %s7, %s264
      %p266 = scmp.lt.s32.totalorder %s18, 1
      %s267 = scalar_select %p266, %s18, 1
      %s268 = smul.addr %s267, 8
      %s269 = scalar_lea.vmem %s0, %s268
      %p270 = scmp.lt.s32.totalorder %s18, 1
      %s271 = scalar_select %p270, %s18, 1
      %s272 = smul.addr %s271, 8
      %s273 = scalar_lea.vmem %s7, %s272
      %v274 = vld [vmem:[%s269] sm:$0xff]
      %v275 = vld [vmem:[%s1] sm:$0xff]
      %v276 = vld [vmem:[%s1 + $0x8] sm:$0xff]
      %v277 = vld [vmem:[%s1 + $0x10] sm:$0xff]
      %v278 = vld [vmem:[%s1 + $0x18] sm:$0xff]
      %v279 = vld [vmem:[%s1 + $0x20] sm:$0xff]
      %v280 = vld [vmem:[%s1 + $0x28] sm:$0xff]
      %v281 = vld [vmem:[%s1 + $0x30] sm:$0xff]
      %v282 = vld [vmem:[%s1 + $0x38] sm:$0xff]
      %v283 = vld [vmem:[%s1 + $0x40] sm:$0xff]
      %v284 = vld [vmem:[%s1 + $0x48] sm:$0xff]
      %v285 = vld [vmem:[%s1 + $0x50] sm:$0xff]
      %v286 = vld [vmem:[%s1 + $0x58] sm:$0xff]
      %v287 = vld [vmem:[%s1 + $0x60] sm:$0xff]
      %v288 = vld [vmem:[%s1 + $0x68] sm:$0xff]
      %v289 = vld [vmem:[%s1 + $0x70] sm:$0xff]
      %v290 = vld [vmem:[%s1 + $0x78] sm:$0xff]
      %v291 = vld [vmem:[%s2] sm:$0x1]
      %v293 = vperm.slane %v291, 0
      %295 = vmatpush.msra.mxu0 %v290
      %296 = vmatpush.msra.mxu0 %v289
      %297 = vmatpush.msra.mxu0 %v288
      %298 = vmatpush.msra.mxu0 %v287
      %299 = vmatpush.msra.mxu0 %v286
      %300 = vmatpush.msra.mxu0 %v285
      %301 = vmatpush.msra.mxu0 %v284
      %302 = vmatpush.msra.mxu0 %v283
      %303 = vmatpush.msra.mxu0 %v282
      %304 = vmatpush.msra.mxu0 %v281
      %305 = vmatpush.msra.mxu0 %v280
      %306 = vmatpush.msra.mxu0 %v279
      %307 = vmatpush.msra.mxu0 %v278
      %308 = vmatpush.msra.mxu0 %v277
      %309 = vmatpush.msra.mxu0 %v276
      %310 = vmatpush.msra.mxu0 %v275
      %311 = vmatmul.f32.gmra.mxu0 %v274
      %v312 = vpop.f32.mrf.mxu0
      %v313 = vadd.f32 %v293, %v312
      %314 = vdwg.mxu0
      %v315 = vmax.f32 %v313, 0.0
      %v316 = vld [vmem:[%s3] sm:$0xff]
      %v317 = vld [vmem:[%s3 + $0x8] sm:$0xff]
      %v318 = vld [vmem:[%s3 + $0x10] sm:$0xff]
      %v319 = vld [vmem:[%s3 + $0x18] sm:$0xff]
      %v320 = vld [vmem:[%s3 + $0x20] sm:$0xff]
      %v321 = vld [vmem:[%s3 + $0x28] sm:$0xff]
      %v322 = vld [vmem:[%s3 + $0x30] sm:$0xff]
      %v323 = vld [vmem:[%s3 + $0x38] sm:$0xff]
      %v324 = vld [vmem:[%s3 + $0x40] sm:$0xff]
      %v325 = vld [vmem:[%s3 + $0x48] sm:$0xff]
      %v326 = vld [vmem:[%s3 + $0x50] sm:$0xff]
      %v327 = vld [vmem:[%s3 + $0x58] sm:$0xff]
      %v328 = vld [vmem:[%s3 + $0x60] sm:$0xff]
      %v329 = vld [vmem:[%s3 + $0x68] sm:$0xff]
      %v330 = vld [vmem:[%s3 + $0x70] sm:$0xff]
      %v331 = vld [vmem:[%s3 + $0x78] sm:$0xff]
      %v332 = vld [vmem:[%s4] sm:$0x1]
      %v334 = vperm.slane %v332, 0
      %336 = vmatpush.msra.mxu0 %v331
      %337 = vmatpush.msra.mxu0 %v330
      %338 = vmatpush.msra.mxu0 %v329
      %339 = vmatpush.msra.mxu0 %v328
      %340 = vmatpush.msra.mxu0 %v327
      %341 = vmatpush.msra.mxu0 %v326
      %342 = vmatpush.msra.mxu0 %v325
      %343 = vmatpush.msra.mxu0 %v324
      %344 = vmatpush.msra.mxu0 %v323
      %345 = vmatpush.msra.mxu0 %v322
      %346 = vmatpush.msra.mxu0 %v321
      %347 = vmatpush.msra.mxu0 %v320
      %348 = vmatpush.msra.mxu0 %v319
      %349 = vmatpush.msra.mxu0 %v318
      %350 = vmatpush.msra.mxu0 %v317
      %351 = vmatpush.msra.mxu0 %v316
      %352 = vmatmul.f32.gmra.mxu0 %v315
      %v353 = vpop.f32.mrf.mxu0
      %v354 = vadd.f32 %v334, %v353
      %355 = vdwg.mxu0
      %v356 = vmax.f32 %v354, 0.0
      %v357 = vld [vmem:[%s5] sm:$0xff]
      %v358 = vld [vmem:[%s5 + $0x8] sm:$0xff]
      %v359 = vld [vmem:[%s5 + $0x10] sm:$0xff]
      %v360 = vld [vmem:[%s5 + $0x18] sm:$0xff]
      %v361 = vld [vmem:[%s5 + $0x20] sm:$0xff]
      %v362 = vld [vmem:[%s5 + $0x28] sm:$0xff]
      %v363 = vld [vmem:[%s5 + $0x30] sm:$0xff]
      %v364 = vld [vmem:[%s5 + $0x38] sm:$0xff]
      %v365 = vld [vmem:[%s5 + $0x40] sm:$0xff]
      %v366 = vld [vmem:[%s5 + $0x48] sm:$0xff]
      %v367 = vld [vmem:[%s5 + $0x50] sm:$0xff]
      %v368 = vld [vmem:[%s5 + $0x58] sm:$0xff]
      %v369 = vld [vmem:[%s5 + $0x60] sm:$0xff]
      %v370 = vld [vmem:[%s5 + $0x68] sm:$0xff]
      %v371 = vld [vmem:[%s5 + $0x70] sm:$0xff]
      %v372 = vld [vmem:[%s5 + $0x78] sm:$0xff]
      %v373 = vld [vmem:[%s6] sm:$0x1]
      %v375 = vperm.slane %v373, 0
      %377 = vmatpush.msra.mxu0 %v372
      %378 = vmatpush.msra.mxu0 %v371
      %379 = vmatpush.msra.mxu0 %v370
      %380 = vmatpush.msra.mxu0 %v369
      %381 = vmatpush.msra.mxu0 %v368
      %382 = vmatpush.msra.mxu0 %v367
      %383 = vmatpush.msra.mxu0 %v366
      %384 = vmatpush.msra.mxu0 %v365
      %385 = vmatpush.msra.mxu0 %v364
      %386 = vmatpush.msra.mxu0 %v363
      %387 = vmatpush.msra.mxu0 %v362
      %388 = vmatpush.msra.mxu0 %v361
      %389 = vmatpush.msra.mxu0 %v360
      %390 = vmatpush.msra.mxu0 %v359
      %391 = vmatpush.msra.mxu0 %v358
      %392 = vmatpush.msra.mxu0 %v357
      %393 = vmatmul.f32.gmra.mxu0 %v356
      %v394 = vpop.f32.mrf.mxu0
      %v395 = vadd.f32 %v375, %v394
      %396 = vdwg.mxu0
      %397 = vst [vmem:[%s273] sm:$0xff] %v395
      %p398 = scmp.lt.s32.totalorder %s18, 1
      %s399 = scalar_select %p398, %s18, 1
      %s400 = smul.addr %s399, 8
      %s401 = scalar_lea.vmem %s7, %s400
      // Predicated region
      $region49: #{mlp_forward.1} parent=47 // pred_check
        %p402 = pneg %p188
      $region50: #{mlp_forward.1} parent=47 // pred_check_branch
        %404 = sbr.rel (%p402) target = $region52
      $region51: #{mlp_forward.1} parent=47 // pred_region
        _
      $region52: #{mlp_forward.1} parent=47 // pred_fallthru
        _
    $region48: #{mlp_forward.1} parent=5 // pred_fallthru
      _
    %p405 = scmp.le.s32.totalorder 2, %s13
    // Predicated region
    $region53: #{mlp_forward.1} parent=5 // pred_check
      %p406 = pneg %p405
    $region54: #{mlp_forward.1} parent=5 // pred_check_branch
      %408 = sbr.rel (%p406) target = $region56
    $region55: #{mlp_forward.1} parent=5 // pred_region
      %s409 = ssub.s32 %s13, 2
      // Predicated region
      $region57: #{mlp_forward.1} parent=55 // pred_check
        %p410 = pneg %p194
      $region58: #{mlp_forward.1} parent=55 // pred_check_branch
        %412 = sbr.rel (%p410) target = $region60
      $region59: #{mlp_forward.1} parent=55 // pred_region
        %p413 = scmp.lt.s32.totalorder %s19, 1
        %s414 = scalar_select %p413, %s19, 1
        %s415 = smul.addr %s414, 8
        %s416 = scalar_lea.vmem %s7, %s415
      $region60: #{mlp_forward.1} parent=55 // pred_fallthru
        _
    $region56: #{mlp_forward.1} parent=5 // pred_fallthru
      _
  $region6: #{mlp_forward.1} parent=0 // loop_footer
    %s17 = sadd.s32 1, %s13
  $region7: #{mlp_forward.1} parent=0 // loop_footer_branch
    %12 = sbr.rel target = $region3
  $region8: #{mlp_forward.1} parent=0 // loop_exit
    _

</llo_original>
